<compile_context>
chip_gen: v6e
topology: v6e:2x2x1
jax: 0.10.0
libtpu: 0.0.40
codegen_flags: <defaults>
</compile_context>

<pallas_src>
import math

import jax
import jax.numpy as jnp
from jax import lax
from jax.experimental import pallas as pl
from jax.experimental.pallas import tpu as pltpu


def _round_up(n, m):
    return ((n + m - 1) // m) * m


def fpn_kernel(w_ref, b_ref, cm_ref, x_ref, out_ref):
    """One batch tile.

    w_ref  : (T, D)      matmul dtype (bf16), resident across the grid
    b_ref  : (T, 1)      f32 bias
    cm_ref : (2T+1, T)   f32 constants: [zeros; tril; tril - 0.5*I]
    x_ref  : (TB, D)     matmul dtype, natural (batch, feature) layout
    out_ref: (2T+2, TB)  f32: rows 0..T taus, rows T+1..2T taus_hat, row 2T+1 entropy
    """
    w = w_ref[...]                      # (T, D)
    x = x_ref[...]                      # (TB, D)

    # logits (T, TB): contract the feature dim of both operands on the MXU;
    # batch lands on the lane axis, no in-kernel transpose needed.
    logits = lax.dot_general(
        w, x, dimension_numbers=(((1,), (1,)), ((), ())),
        preferred_element_type=jnp.float32) + b_ref[...]

    # LogSoftmax over the tau axis (axis 0); single exp pass reused everywhere.
    m = jnp.max(logits, axis=0, keepdims=True)           # (1, TB)
    z = logits - m                                       # (T, TB)
    e = jnp.exp(z)                                       # (T, TB)  (EUP)
    s = jnp.sum(e, axis=0, keepdims=True)                # (1, TB)
    q_probs = e * pl.reciprocal(s, approx=False)         # exact: taus sum to 1
    lse = jnp.log(s)                                     # (1, TB)

    n = cm_ref.shape[0]                                  # 2T + 1 (static)
    # taus (cumsum with leading 0) and taus_hat (bin midpoints) via ONE
    # constant-matrix matmul -> one lane-dense store.
    out_ref[:n, :] = jnp.dot(cm_ref[...], q_probs,
                             preferred_element_type=jnp.float32)
    # entropy = -(log_softmax * p).sum = lse - sum(z * p)
    out_ref[n:, :] = lse - jnp.sum(z * q_probs, axis=0, keepdims=True)


def _pick_tb(b_pad, tb_req, per_lane_bytes, vmem_budget_bytes):
    """Largest TB (multiple of 128) dividing b_pad, <= request, within budget."""
    tb_cap = max(128, (vmem_budget_bytes // max(per_lane_bytes, 1)) // 128 * 128)
    tb_max = max(128, min(_round_up(tb_req, 128), b_pad, tb_cap))
    m = b_pad // 128
    q = tb_max // 128
    best = 1
    for d in range(1, q + 1):
        if m % d == 0:
            best = d
    return 128 * best


def fpn_forward(x, w, b, *, tb=1024, compute_dtype=jnp.bfloat16,
                vmem_budget_bytes=24 << 20):
    """x: (B, D) f32, w: (D, T) f32, b: (1, T) f32.
    Returns taus (B, T+1), taus_hat (B, T), entropy (B, 1), all f32."""
    B, D = x.shape
    T = w.shape[1]

    # Pad batch only to the 128-lane granule (waste < 128 rows), then pick a
    # tile that exactly divides the padded batch and fits the VMEM budget.
    B_pad = _round_up(max(B, 128), 128)
    itemsize = jnp.dtype(compute_dtype).itemsize
    per_lane_bytes = 2 * D * itemsize + 2 * (2 * T + 2) * 4   # dbl-buffered in+out
    TB = _pick_tb(B_pad, tb, per_lane_bytes, vmem_budget_bytes)
    grid = (B_pad // TB,)

    # TODO(synk): in production, fuse this cast (and the whole head) into the
    #             kernel that produces x instead of materializing bf16 x here.
    x_in = x.astype(compute_dtype)
    if B_pad != B:
        x_in = jnp.pad(x_in, ((0, B_pad - B), (0, 0)))
    w_t = w.T.astype(compute_dtype)                      # (T, D)
    b_t = jnp.reshape(b, (T, 1)).astype(jnp.float32)     # (T, 1)

    tril = jnp.tril(jnp.ones((T, T), jnp.float32))
    cm = jnp.concatenate(
        [jnp.zeros((1, T), jnp.float32),                 # taus row 0 (zero)
         tril,                                           # taus rows 1..T (cumsum)
         tril - 0.5 * jnp.eye(T, dtype=jnp.float32)],    # taus_hat (midpoints)
        axis=0)                                          # (2T+1, T)

    const = lambda i: (0, 0)
    slab = pl.pallas_call(
        fpn_kernel,
        out_shape=jax.ShapeDtypeStruct((2 * T + 2, B_pad), jnp.float32),
        grid=grid,
        in_specs=[
            pl.BlockSpec((T, D), const),                 # w (resident)
            pl.BlockSpec((T, 1), const),                 # b
            pl.BlockSpec((2 * T + 1, T), const),         # fused constant matrix
            pl.BlockSpec((TB, D), lambda i: (i, 0)),     # x tile, natural layout
        ],
        out_specs=pl.BlockSpec((2 * T + 2, TB), lambda i: (0, i)),
        compiler_params=pltpu.CompilerParams(
            dimension_semantics=("parallel",),
            vmem_limit_bytes=32 << 20),
    )(w_t, b_t, cm, x_in)

    # One transpose pass over the combined slab, then cheap column splits.
    # (Consumers that accept the column-major (2T+2, B) slab can skip this.)
    outs = slab[:, :B].T                                 # (B, 2T+2)
    taus = outs[:, :T + 1]
    taus_hat = outs[:, T + 1:2 * T + 1]
    entropy = outs[:, 2 * T + 1:]
    return taus, taus_hat, entropy


def init_fpn_params(key, layer_size, num_tau):
    """Matches the PyTorch module: Linear(layer_size, num_tau) with
    xavier_uniform_(gain=0.01) weight and default uniform bias."""
    kw, kb = jax.random.split(key)
    gain = 0.01
    bound_w = gain * math.sqrt(6.0 / (layer_size + num_tau))
    w = jax.random.uniform(kw, (layer_size, num_tau), jnp.float32,
                           minval=-bound_w, maxval=bound_w)
    bound_b = 1.0 / math.sqrt(layer_size)
    b = jax.random.uniform(kb, (1, num_tau), jnp.float32,
                           minval=-bound_b, maxval=bound_b)
    return w, b


def fpn_reference(x, w, b):
    """Pure-JAX reference mirroring the PyTorch forward."""
    logits = x @ w + b
    q = jax.nn.log_softmax(logits, axis=1)
    q_probs = jnp.exp(q)
    taus = jnp.cumsum(q_probs, axis=1)
    taus = jnp.concatenate([jnp.zeros((x.shape[0], 1), x.dtype), taus], axis=1)
    taus_ = (taus[:, :-1] + taus[:, 1:]) / 2.0
    entropy = -jnp.sum(q * q_probs, axis=-1, keepdims=True)
    return taus, taus_, entropy


if __name__ == "__main__":
    batch, layer_size, num_tau = 4, 32, 8

    key = jax.random.PRNGKey(0)
    kx, kp = jax.random.split(key)
    x = jax.random.normal(kx, (batch, layer_size), jnp.float32)
    w, b = init_fpn_params(kp, layer_size, num_tau)

    taus, taus_hat, entropy = fpn_forward(x, w, b)
    jax.block_until_ready((taus, taus_hat, entropy))

    r_taus, r_taus_hat, r_ent = fpn_reference(x, w, b)
    assert taus.shape == (batch, num_tau + 1)
    assert taus_hat.shape == (batch, num_tau)
    assert entropy.shape == (batch, 1)
    # bf16 matmul inputs (f32 accumulation): tolerance loosened vs pure f32.
    assert jnp.allclose(taus, r_taus, atol=3e-3)
    assert jnp.allclose(taus_hat, r_taus_hat, atol=3e-3)
    assert jnp.allclose(entropy, r_ent, atol=3e-3)
    # Probs are normalized in f32, so taus still ends (very close to) 1.
    assert jnp.allclose(taus[:, -1], 1.0, atol=1e-4)

    # Exercise the multi-step grid + 128-granule tail padding (B=300 -> 384).
    x2 = jax.random.normal(jax.random.PRNGKey(1), (300, layer_size), jnp.float32)
    t2, th2, e2 = fpn_forward(x2, w, b, tb=128)
    jax.block_until_ready((t2, th2, e2))
    r2_taus, r2_hat, r2_ent = fpn_reference(x2, w, b)
    assert t2.shape == (300, num_tau + 1)
    assert jnp.allclose(t2, r2_taus, atol=3e-3)
    assert jnp.allclose(th2, r2_hat, atol=3e-3)
    assert jnp.allclose(e2, r2_ent, atol=3e-3)

    print("KERNEL_OK")
</pallas_src>

<mosaic_0001>
module attributes {stable_mosaic.version = 11 : i64} {
  func.func @fpn_kernel(%arg0: i32, %arg1: memref<8x32xbf16, #tpu.memory_space<vmem>>, %arg2: memref<8x1xf32, #tpu.memory_space<vmem>>, %arg3: memref<17x8xf32, #tpu.memory_space<vmem>>, %arg4: memref<128x32xbf16, #tpu.memory_space<vmem>>, %arg5: memref<18x128xf32, #tpu.memory_space<vmem>>) attributes {dimension_semantics = [#tpu.dimension_semantics<parallel>], iteration_bounds = array<i64: 1>, scalar_prefetch = 0 : i64, scratch_operands = 0 : i64, tpu.core_type = #tpu.core_type<tc>, window_params = [{pipeline_mode = #tpu.pipeline_mode<synchronous>, transform_indices = @transform_0, window_bounds = array<i64: 8, 32>}, {pipeline_mode = #tpu.pipeline_mode<synchronous>, transform_indices = @transform_1, window_bounds = array<i64: 8, 1>}, {pipeline_mode = #tpu.pipeline_mode<synchronous>, transform_indices = @transform_2, window_bounds = array<i64: 17, 8>}, {transform_indices = @transform_3, window_bounds = array<i64: 128, 32>}, {transform_indices = @transform_4, window_bounds = array<i64: 18, 128>}]} {
    %c0 = arith.constant 0 : index
    %c0_0 = arith.constant 0 : index
    %0 = vector.load %arg1[%c0, %c0_0] : memref<8x32xbf16, #tpu.memory_space<vmem>>, vector<8x32xbf16>
    %c0_1 = arith.constant 0 : index
    %c0_2 = arith.constant 0 : index
    %1 = vector.load %arg4[%c0_1, %c0_2] : memref<128x32xbf16, #tpu.memory_space<vmem>>, vector<128x32xbf16>
    %cst = arith.constant dense<0.000000e+00> : vector<8x128xf32>
    %2 = tpu.matmul %0, %1, %cst {dimension_numbers = #tpu.dot_dimension_numbers<[1], [1], [0], [0], [0, 0, 1, 0], [], []>} : vector<8x32xbf16>, vector<128x32xbf16>, vector<8x128xf32> -> vector<8x128xf32>
    %c0_3 = arith.constant 0 : index
    %c0_4 = arith.constant 0 : index
    %3 = vector.load %arg2[%c0_3, %c0_4] : memref<8x1xf32, #tpu.memory_space<vmem>>, vector<8x1xf32>
    %4 = vector.broadcast %3 : vector<8x1xf32> to vector<8x128xf32>
    %5 = arith.addf %2, %4 : vector<8x128xf32>
    %cst_5 = arith.constant dense<0xFF800000> : vector<128xf32>
    %6 = vector.multi_reduction <maximumf>, %5, %cst_5 [0] : vector<8x128xf32> to vector<128xf32>
    %7 = vector.shape_cast %6 : vector<128xf32> to vector<1x128xf32>
    %8 = vector.broadcast %7 : vector<1x128xf32> to vector<8x128xf32>
    %9 = arith.subf %5, %8 : vector<8x128xf32>
    %10 = math.exp %9 : vector<8x128xf32>
    %cst_6 = arith.constant dense<0.000000e+00> : vector<128xf32>
    %11 = vector.multi_reduction <add>, %10, %cst_6 [0] : vector<8x128xf32> to vector<128xf32>
    %12 = vector.shape_cast %11 : vector<128xf32> to vector<1x128xf32>
    %13 = tpu.reciprocal %12 : vector<1x128xf32> -> vector<1x128xf32>
    %14 = vector.broadcast %13 : vector<1x128xf32> to vector<8x128xf32>
    %15 = arith.mulf %10, %14 : vector<8x128xf32>
    %16 = math.log %12 : vector<1x128xf32>
    %c0_7 = arith.constant 0 : index
    %c0_8 = arith.constant 0 : index
    %17 = vector.load %arg3[%c0_7, %c0_8] : memref<17x8xf32, #tpu.memory_space<vmem>>, vector<17x8xf32>
    %cst_9 = arith.constant dense<0.000000e+00> : vector<17x128xf32>
    %18 = tpu.matmul %17, %15, %cst_9 {dimension_numbers = #tpu.dot_dimension_numbers<[1], [0], [0], [1], [0, 0, 1, 1], [], []>} : vector<17x8xf32>, vector<8x128xf32>, vector<17x128xf32> -> vector<17x128xf32>
    %c0_10 = arith.constant 0 : index
    %c0_11 = arith.constant 0 : index
    %19 = vector.load %arg5[%c0_10, %c0_11] : memref<18x128xf32, #tpu.memory_space<vmem>>, vector<17x128xf32>
    tpu.vector_store %arg5[%c0_10, %c0_11], %18 {strides = array<i32>} : memref<18x128xf32, #tpu.memory_space<vmem>>, vector<17x128xf32>,
    %20 = arith.mulf %9, %15 : vector<8x128xf32>
    %cst_12 = arith.constant dense<0.000000e+00> : vector<128xf32>
    %21 = vector.multi_reduction <add>, %20, %cst_12 [0] : vector<8x128xf32> to vector<128xf32>
    %22 = vector.shape_cast %21 : vector<128xf32> to vector<1x128xf32>
    %23 = arith.subf %16, %22 : vector<1x128xf32>
    %c17 = arith.constant 17 : index
    %c0_13 = arith.constant 0 : index
    %24 = vector.load %arg5[%c17, %c0_13] : memref<18x128xf32, #tpu.memory_space<vmem>>, vector<1x128xf32>
    tpu.vector_store %arg5[%c17, %c0_13], %23 {strides = array<i32>} : memref<18x128xf32, #tpu.memory_space<vmem>>, vector<1x128xf32>,
    return
  }
  func.func @transform_0(%arg0: i32) -> (i32, i32) {
    %c0_i32 = arith.constant 0 : i32
    %c0_i32_0 = arith.constant 0 : i32
    %c0_i32_1 = arith.constant 0 : i32
    return %c0_i32, %c0_i32_0 : i32, i32
  }
  func.func @transform_1(%arg0: i32) -> (i32, i32) {
    %c0_i32 = arith.constant 0 : i32
    %c0_i32_0 = arith.constant 0 : i32
    %c0_i32_1 = arith.constant 0 : i32
    return %c0_i32, %c0_i32_0 : i32, i32
  }
  func.func @transform_2(%arg0: i32) -> (i32, i32) {
    %c0_i32 = arith.constant 0 : i32
    %c0_i32_0 = arith.constant 0 : i32
    %c0_i32_1 = arith.constant 0 : i32
    return %c0_i32, %c0_i32_0 : i32, i32
  }
  func.func @transform_3(%arg0: i32) -> (i32, i32) {
    %c0_i32 = arith.constant 0 : i32
    %c0_i32_0 = arith.constant 0 : i32
    return %arg0, %c0_i32 : i32, i32
  }
  func.func @transform_4(%arg0: i32) -> (i32, i32) {
    %c0_i32 = arith.constant 0 : i32
    %c0_i32_0 = arith.constant 0 : i32
    return %c0_i32, %arg0 : i32, i32
  }
}

</mosaic_0001>

<llo_original>
// kernel: tpu_custom_call.1
$region0: #{tpu_custom_call.1}
  #allocation0 [shape = 'u32[]', space=smem, size = 0x4, offset = 0x4, fixed_abs, tag = 'smem constant byte address 0x4 - core index']
  #allocation1 [shape = 'u32[144,128]{1,0:T(1,128)}', space=vmem, size = 0x12000, scoped, tag = 'internal scratch']
  %s0 = inlined_call_operand.vmem [shape: bf16[8,32], index: 0, kind: input, shape index: {}]
  %s1 = inlined_call_operand.vmem [shape: f32[8,1], index: 1, kind: input, shape index: {}]
  %s2 = inlined_call_operand.vmem [shape: f32[17,8], index: 2, kind: input, shape index: {}]
  %s3 = inlined_call_operand.vmem [shape: bf16[128,32], index: 3, kind: input, shape index: {}]
  %s4 = inlined_call_operand.hbm [shape: f32[18,128], index: 4, kind: output, shape index: {}]
  %s5 = sld [smem:[#allocation0]]
  $region26: #{tpu_custom_call.1} parent=0
    _
  %s7 = ssub.s32 1, %s5
  %s8 = scalar_select 0, %s7, %s5
  $region1: #{tpu_custom_call.1} parent=0
    #allocation2 [shape = 'u8[12288]{0}', space=vmem, size = 0x3000, scoped, tag = 'output window, operand 0, single buffered']
    #allocation3 [shape = 's32[1]{0}', space=sflag, size = 0x4, scoped, tag = 'scoped memory for tpu_custom_call.1']
    %9 = vsyncpa [#allocation3], 0
    // Predicated region
    $region2: #{tpu_custom_call.1} parent=1 // pred_check
      _
    $region3: #{tpu_custom_call.1} parent=1 // pred_check_branch
      %11 = sbr.rel (0) target = $region5
    $region4: #{tpu_custom_call.1} parent=1 // pred_region
      _
    $region5: #{tpu_custom_call.1} parent=1 // pred_fallthru
      _
    // Predicated region
    $region6: #{tpu_custom_call.1} parent=1 // pred_check
      _
    $region7: #{tpu_custom_call.1} parent=1 // pred_check_branch
      %13 = sbr.rel (0) target = $region9
    $region8: #{tpu_custom_call.1} parent=1 // pred_region
      _
    $region9: #{tpu_custom_call.1} parent=1 // pred_fallthru
      _
    // Predicated region
    $region10: #{tpu_custom_call.1} parent=1 // pred_check
      _
    $region11: #{tpu_custom_call.1} parent=1 // pred_check_branch
      %15 = sbr.rel (0) target = $region13
    $region12: #{tpu_custom_call.1} parent=1 // pred_region
      _
    $region13: #{tpu_custom_call.1} parent=1 // pred_fallthru
      _
    // Predicated region
    $region14: #{tpu_custom_call.1} parent=1 // pred_check
      _
    $region15: #{tpu_custom_call.1} parent=1 // pred_check_branch
      %17 = sbr.rel (0) target = $region17
    $region16: #{tpu_custom_call.1} parent=1 // pred_region
      _
    $region17: #{tpu_custom_call.1} parent=1 // pred_fallthru
      _
    %v19 = vld [vmem:[%s0] sm:$0xf]
    %v20 = vld [vmem:[%s3] sm:$0xf]
    %v21 = vld [vmem:[%s3 + $0x4] sm:$0xf]
    %v22 = vld [vmem:[%s3 + $0x8] sm:$0xf]
    %v23 = vld [vmem:[%s3 + $0xc] sm:$0xf]
    %v24 = vld [vmem:[%s3 + $0x10] sm:$0xf]
    %v25 = vld [vmem:[%s3 + $0x14] sm:$0xf]
    %v26 = vld [vmem:[%s3 + $0x18] sm:$0xf]
    %v27 = vld [vmem:[%s3 + $0x1c] sm:$0xf]
    %v28 = vld [vmem:[%s3 + $0x20] sm:$0xf]
    %v29 = vld [vmem:[%s3 + $0x24] sm:$0xf]
    %v30 = vld [vmem:[%s3 + $0x28] sm:$0xf]
    %v31 = vld [vmem:[%s3 + $0x2c] sm:$0xf]
    %v32 = vld [vmem:[%s3 + $0x30] sm:$0xf]
    %v33 = vld [vmem:[%s3 + $0x34] sm:$0xf]
    %v34 = vld [vmem:[%s3 + $0x38] sm:$0xf]
    %v35 = vld [vmem:[%s3 + $0x3c] sm:$0xf]
    %v36 = vld [vmem:[%s1] sm:$0xff]
    %38 = vset.pattern.permute.xlu0 0
    %39 = vperm.xlu0 %38, %v36
    %v40 = vpop.permute.xlu0 %39
    %v58 = vunpack.c.l.b16 %v20
    %v59 = vunpack.c.l.b16 %v21
    %v60 = vunpack.c.l.b16 %v22
    %v61 = vunpack.c.l.b16 %v23
    %v62 = vunpack.c.l.b16 %v24
    %v63 = vunpack.c.l.b16 %v25
    %v64 = vunpack.c.l.b16 %v26
    %v65 = vunpack.c.l.b16 %v27
    %v66 = vunpack.c.l.b16 %v28
    %v67 = vunpack.c.l.b16 %v29
    %v68 = vunpack.c.l.b16 %v30
    %v69 = vunpack.c.l.b16 %v31
    %v70 = vunpack.c.l.b16 %v32
    %v71 = vunpack.c.l.b16 %v33
    %v72 = vunpack.c.l.b16 %v34
    %v73 = vunpack.c.l.b16 %v35
    %v74 = vpack.c.b16 %v59, %v58
    %v75 = vpack.c.b16 %v61, %v60
    %v76 = vpack.c.b16 %v63, %v62
    %v77 = vpack.c.b16 %v65, %v64
    %v78 = vpack.c.b16 %v67, %v66
    %v79 = vpack.c.b16 %v69, %v68
    %v80 = vpack.c.b16 %v71, %v70
    %v81 = vpack.c.b16 %v73, %v72
    %vm82 = vcmask 261120
    %v84 = vsel %vm82, %v19, 0
    %v87 = vsel %vm82, %v74, 0
    %v90 = vsel %vm82, %v75, 0
    %v93 = vsel %vm82, %v76, 0
    %v96 = vsel %vm82, %v77, 0
    %v99 = vsel %vm82, %v78, 0
    %v102 = vsel %vm82, %v79, 0
    %v105 = vsel %vm82, %v80, 0
    %v108 = vsel %vm82, %v81, 0
    %110 = vmatprep.subr.bf16.mxu0 0
    %111 = vmatpush1.bf16.xpose.msra.mxu0 %v108
    %112 = vmatprep.subr.bf16.mxu0 0
    %113 = vmatpush1.bf16.xpose.msra.mxu0 %v105
    %114 = vmatprep.subr.bf16.mxu0 0
    %115 = vmatpush1.bf16.xpose.msra.mxu0 %v102
    %116 = vmatprep.subr.bf16.mxu0 0
    %117 = vmatpush1.bf16.xpose.msra.mxu0 %v99
    %118 = vmatprep.subr.bf16.mxu0 0
    %119 = vmatpush1.bf16.xpose.msra.mxu0 %v96
    %120 = vmatprep.subr.bf16.mxu0 0
    %121 = vmatpush1.bf16.xpose.msra.mxu0 %v93
    %122 = vmatprep.subr.bf16.mxu0 0
    %123 = vmatpush1.bf16.xpose.msra.mxu0 %v90
    %124 = vmatprep.subr.bf16.mxu0 0
    %125 = vmatpush1.bf16.xpose.msra.mxu0 %v87
    %126 = vmatprep.subr.bf16.mxu0 0
    %127 = vmatpush2.bf16.xpose.msra.mxu0 0
    %128 = vmatprep.subr.bf16.mxu0 0
    %129 = vmatpush2.bf16.xpose.msra.mxu0 0
    %130 = vmatprep.subr.bf16.mxu0 0
    %131 = vmatpush2.bf16.xpose.msra.mxu0 0
    %132 = vmatprep.subr.bf16.mxu0 0
    %133 = vmatpush2.bf16.xpose.msra.mxu0 0
    %134 = vmatprep.subr.bf16.mxu0 0
    %135 = vmatpush2.bf16.xpose.msra.mxu0 0
    %136 = vmatprep.subr.bf16.mxu0 0
    %137 = vmatpush2.bf16.xpose.msra.mxu0 0
    %138 = vmatprep.subr.bf16.mxu0 0
    %139 = vmatpush2.bf16.xpose.msra.mxu0 0
    %140 = vmatprep.subr.bf16.mxu0 0
    %141 = vmatpush2.bf16.xpose.msra.mxu0 0
    %142 = vmatprep.mubr.bf16.mxu0 0
    %143 = vmatmul.mubr.bf16.gmra.mxu0 %v84
    %v144 = vpop.f32.mrf.mxu0
    %v145 = vadd.f32 %v40, %v144
    %v146 = vpop.f32.mrf.mxu0
    %v147 = vpop.f32.mrf.mxu0
    %v148 = vpop.f32.mrf.mxu0
    %149 = vdwg.mxu0
    %v150 = vrot.slane %v145, 4
    %v151 = vmax.f32 %v145, %v150
    %v152 = vrot.slane %v151, 2
    %v153 = vmax.f32 %v151, %v152
    %v154 = vrot.slane %v153, 1
    %v155 = vmax.f32 %v153, %v154
    %v156 = vsub.f32 %v145, %v155
    %v157 = vmul.f32 %v156, 1.442695
    %v158 = vpow.pop %v157
    %v159 = vrot.slane %v158, 4
    %v160 = vadd.f32 %v158, %v159
    %v161 = vrot.slane %v160, 2
    %v162 = vadd.f32 %v160, %v161
    %v163 = vrot.slane %v162, 1
    %v164 = vadd.f32 %v162, %v163
    %v165 = vrcp.pop %v164
    %v166 = vmul.f32 %v158, %v165
    %v167 = vlog2.pop %v164
    %v168 = vmul.f32 %v167, 0.6931472
    %v169 = vld [vmem:[%s2] sm:$0xff]
    %v170 = vld [vmem:[%s2 + $0x8] sm:$0xff]
    %v171 = vld [vmem:[%s2 + $0x10] sm:$0x1]
    %vm172 = vcmask 64512
    %v174 = vsel %vm172, %v169, 0
    %v177 = vsel %vm172, %v170, 0
    %v180 = vsel %vm172, %v171, 0
    %182 = vmatprep.subr.mxu0 0.0
    %183 = vmatpush1.msra.mxu0 0.0
    %184 = vmatprep.subr.mxu0 0.0
    %185 = vmatpush1.msra.mxu0 0.0
    %186 = vmatprep.subr.mxu0 0.0
    %187 = vmatpush1.msra.mxu0 0.0
    %188 = vmatprep.subr.mxu0 0.0
    %189 = vmatpush1.msra.mxu0 0.0
    %190 = vmatprep.subr.mxu0 0.0
    %191 = vmatpush1.msra.mxu0 0.0
    %192 = vmatprep.subr.mxu0 0.0
    %193 = vmatpush1.msra.mxu0 0.0
    %194 = vmatprep.subr.mxu0 0.0
    %195 = vmatpush1.msra.mxu0 0.0
    %196 = vmatprep.subr.mxu0 0.0
    %197 = vmatpush1.msra.mxu0 0.0
    %198 = vmatprep.subr.mxu0 0.0
    %199 = vmatpush1.msra.mxu0 0.0
    %200 = vmatprep.subr.mxu0 0.0
    %201 = vmatpush1.msra.mxu0 0.0
    %202 = vmatprep.subr.mxu0 0.0
    %203 = vmatpush1.msra.mxu0 0.0
    %204 = vmatprep.subr.mxu0 0.0
    %205 = vmatpush1.msra.mxu0 0.0
    %206 = vmatprep.subr.mxu0 0.0
    %207 = vmatpush1.msra.mxu0 0.0
    %208 = vmatprep.subr.mxu0 0.0
    %209 = vmatpush1.msra.mxu0 0.0
    %210 = vmatprep.subr.mxu0 0.0
    %211 = vmatpush1.msra.mxu0 0.0
    %212 = vmatprep.subr.mxu0 0.0
    %213 = vmatpush1.msra.mxu0 %v166
    %214 = vmatprep.subr.mxu0 0.0
    %215 = vmatpush2.msra.mxu0 0.0
    %216 = vmatprep.subr.mxu0 0.0
    %217 = vmatpush2.msra.mxu0 0.0
    %218 = vmatprep.subr.mxu0 0.0
    %219 = vmatpush2.msra.mxu0 0.0
    %220 = vmatprep.subr.mxu0 0.0
    %221 = vmatpush2.msra.mxu0 0.0
    %222 = vmatprep.subr.mxu0 0.0
    %223 = vmatpush2.msra.mxu0 0.0
    %224 = vmatprep.subr.mxu0 0.0
    %225 = vmatpush2.msra.mxu0 0.0
    %226 = vmatprep.subr.mxu0 0.0
    %227 = vmatpush2.msra.mxu0 0.0
    %228 = vmatprep.subr.mxu0 0.0
    %229 = vmatpush2.msra.mxu0 0.0
    %230 = vmatprep.subr.mxu0 0.0
    %231 = vmatpush2.msra.mxu0 0.0
    %232 = vmatprep.subr.mxu0 0.0
    %233 = vmatpush2.msra.mxu0 0.0
    %234 = vmatprep.subr.mxu0 0.0
    %235 = vmatpush2.msra.mxu0 0.0
    %236 = vmatprep.subr.mxu0 0.0
    %237 = vmatpush2.msra.mxu0 0.0
    %238 = vmatprep.subr.mxu0 0.0
    %239 = vmatpush2.msra.mxu0 0.0
    %240 = vmatprep.subr.mxu0 0.0
    %241 = vmatpush2.msra.mxu0 0.0
    %242 = vmatprep.subr.mxu0 0.0
    %243 = vmatpush2.msra.mxu0 0.0
    %244 = vmatprep.subr.mxu0 0.0
    %245 = vmatpush2.msra.mxu0 0.0
    %246 = vmatprep.mubr.f32.mxu0 0.0
    %247 = vmatmul.mubr.f32.gmra.mxu0 %v174
    %v248 = vpop.f32.mrf.mxu0
    %v249 = vadd.f32 0.0, %v248
    %v250 = vpop.f32.mrf.mxu0
    %251 = vmatprep.mubr.f32.mxu0 0.0
    %252 = vmatmul.mubr.f32.gmra.mxu0 %v177
    %v253 = vpop.f32.mrf.mxu0
    %v254 = vadd.f32 0.0, %v253
    %v255 = vpop.f32.mrf.mxu0
    %256 = vmatprep.mubr.f32.mxu0 0.0
    %257 = vmatmul.mubr.f32.gmra.mxu0 %v180
    %v258 = vpop.f32.mrf.mxu0
    %v259 = vadd.f32 0.0, %v258
    %v260 = vpop.f32.mrf.mxu0
    %261 = vdwg.mxu0
    %262 = vst [vmem:[#allocation2] sm:$0xff] %v249
    %263 = vst [vmem:[#allocation2 + $0x8] sm:$0xff] %v254
    %264 = vst [vmem:[#allocation2 + $0x10] sm:$0x1] %v259
    %v265 = vmul.f32 %v156, %v166
    %v266 = vrot.slane %v265, 4
    %v267 = vadd.f32 %v265, %v266
    %v268 = vrot.slane %v267, 2
    %v269 = vadd.f32 %v267, %v268
    %v270 = vrot.slane %v269, 1
    %v271 = vadd.f32 %v269, %v270
    %v272 = vsub.f32 %v168, %v271
    %273 = vst [vmem:[#allocation2 + $0x11] sm:$0x1] %v272
    // Predicated region
    $region18: #{tpu_custom_call.1} parent=1 // pred_check
      _
    $region19: #{tpu_custom_call.1} parent=1 // pred_check_branch
      %275 = sbr.rel (0) target = $region21
    $region20: #{tpu_custom_call.1} parent=1 // pred_region
      %s277 = ssub.s32 384, 384
      %278 = vsyncadd [#allocation3], %s277
      %s279 = sshll.u32 [#allocation2], 4
      %s280 = int_to_ptr.vmem [resolvable:$true] %s279
      %285 = dma.vmem_to_hbm [thread:$0]  %s280, 384, %s4, [#allocation3], 128, 128, 8
    $region21: #{tpu_custom_call.1} parent=1 // pred_fallthru
      _
    // Predicated region
    $region22: #{tpu_custom_call.1} parent=1 // pred_check
      _
    $region23: #{tpu_custom_call.1} parent=1 // pred_check_branch
      %287 = sbr.rel (0) target = $region25
    $region24: #{tpu_custom_call.1} parent=1 // pred_region
      %288 = dma.done [#allocation3], 384
    $region25: #{tpu_custom_call.1} parent=1 // pred_fallthru
      _
    %289 = vsyncpa [#allocation3], 1

</llo_original>
